<compile_context>
chip_gen: v6e
topology: v6e:2x2x1
jax: 0.10.0
libtpu: 0.0.40
codegen_flags: <defaults>
</compile_context>

<pallas_src>
import functools

import jax
import jax.numpy as jnp
from jax.experimental import pallas as pl
from jax.experimental.pallas import tpu as pltpu


def _round_up(x, m):
    return (x + m - 1) // m * m


# ----------------------------------------------------------------------------
# Fused GNNDecoder kernel
#   inputs : alpha (1,1), x (Np,Din), keep (Np,1), Wenc^T (Din,Din),
#            Wgcn^T (Din,Dout), bias (1,Dout), adj row-block (RB,Np)
#   scratch: h (Np,Dout)  -- transformed node features, computed once, reused
#   output : out row-block (RB,Dout)
# ----------------------------------------------------------------------------
def _gnn_decoder_kernel(alpha_ref, x_ref, keep_ref, wenc_ref, wgcn_ref, b_ref,
                        adj_ref, out_ref, h_ref):
    # Compute the transformed node features for ALL nodes once (grid step 0),
    # keep them resident in VMEM scratch for every output row-block.
    @pl.when(pl.program_id(0) == 0)
    def _():
        x = x_ref[...]
        a = alpha_ref[...]                                   # (1,1) PReLU slope
        act = jnp.where(x >= 0.0, x, x * a)                  # PReLU
        h1 = jnp.dot(act, wenc_ref[...],
                     preferred_element_type=jnp.float32)     # enc_to_dec (no bias)
        h1 = h1 * keep_ref[...]                              # x[missing] = 0
        h_ref[...] = jnp.dot(h1, wgcn_ref[...],
                             preferred_element_type=jnp.float32)  # GCN linear

    # Aggregate this block of output rows: adj_rows @ h + bias   (fused epilogue)
    out_ref[...] = (
        jnp.dot(adj_ref[...], h_ref[...], preferred_element_type=jnp.float32)
        + b_ref[...]
    ).astype(out_ref.dtype)


# ----------------------------------------------------------------------------
# Dense sym-normalized adjacency (built directly at the padded node count)
# ----------------------------------------------------------------------------
def _gcn_norm_adj(edge_index, num_nodes, padded_nodes):
    # TODO(synk): assumes edge_index contains no pre-existing self-loops.
    A = jnp.zeros((padded_nodes, padded_nodes), jnp.float32)
    A = A.at[edge_index[0], edge_index[1]].add(1.0)
    diag = (jnp.arange(padded_nodes) < num_nodes).astype(jnp.float32)
    A = A + jnp.diag(diag)                                   # self-loops (real nodes)
    deg = A.sum(axis=1)
    dinv = jnp.where(deg > 0, jax.lax.rsqrt(deg), 0.0)
    return A * dinv[:, None] * dinv[None, :]


# ----------------------------------------------------------------------------
# Wrapper
# ----------------------------------------------------------------------------
@jax.jit
def gnn_decoder_forward(params, x, edge_index, mask_vector):
    N, in_dim = x.shape
    out_dim = params["gcn_w"].shape[0]

    # Pad nodes only to a multiple of 8 (sublane) for small graphs; use 128-row
    # output blocks (tiled grid) only when the graph is large.
    Np = _round_up(N, 8)
    if Np <= 512:
        row_block = Np
    else:
        row_block = 128
        Np = _round_up(Np, 128)
    grid = (Np // row_block,)

    x_p = jnp.pad(x.astype(jnp.float32), ((0, Np - N), (0, 0)))
    missing = (mask_vector.reshape(-1) == 1)
    keep = jnp.where(missing, 0.0, 1.0).astype(jnp.float32)
    keep_p = jnp.pad(keep, (0, Np - N)).reshape(Np, 1)

    adj = _gcn_norm_adj(edge_index, N, Np)                   # [Np, Np]

    alpha = params["prelu_a"].astype(jnp.float32).reshape(1, 1)
    wenc_t = params["enc_to_dec_w"].T.astype(jnp.float32)    # [Din, Din]
    wgcn_t = params["gcn_w"].T.astype(jnp.float32)           # [Din, Dout]
    bias = params["gcn_b"].astype(jnp.float32).reshape(1, out_dim)

    out = pl.pallas_call(
        _gnn_decoder_kernel,
        out_shape=jax.ShapeDtypeStruct((Np, out_dim), jnp.float32),
        grid_spec=pltpu.PrefetchScalarGridSpec(
            num_scalar_prefetch=0,
            grid=grid,
            in_specs=[
                pl.BlockSpec((1, 1), lambda i: (0, 0)),               # PReLU slope
                pl.BlockSpec((Np, in_dim), lambda i: (0, 0)),         # x (full)
                pl.BlockSpec((Np, 1), lambda i: (0, 0)),              # keep mask
                pl.BlockSpec((in_dim, in_dim), lambda i: (0, 0)),     # enc_to_dec W^T
                pl.BlockSpec((in_dim, out_dim), lambda i: (0, 0)),    # GCN W^T
                pl.BlockSpec((1, out_dim), lambda i: (0, 0)),         # GCN bias
                pl.BlockSpec((row_block, Np), lambda i: (i, 0)),      # adj row block
            ],
            out_specs=pl.BlockSpec((row_block, out_dim), lambda i: (i, 0)),
            scratch_shapes=[pltpu.VMEM((Np, out_dim), jnp.float32)],  # h (all nodes)
        ),
        # scratch h is written at step 0 and reused by later row blocks -> must be
        # a sequential ("arbitrary") axis, not sharded across TensorCores.
        compiler_params=pltpu.CompilerParams(
            dimension_semantics=("arbitrary",)),
    )(alpha, x_p, keep_p, wenc_t, wgcn_t, bias, adj)

    return out[:N]


# ----------------------------------------------------------------------------
# Pure-JAX reference (for correctness check)
# ----------------------------------------------------------------------------
def gnn_decoder_reference(params, x, edge_index, mask_vector):
    N = x.shape[0]
    a = params["prelu_a"].reshape(())
    h = jnp.where(x >= 0.0, x, a * x)
    h = h @ params["enc_to_dec_w"].T
    missing = (mask_vector.reshape(-1) == 1)
    h = jnp.where(missing[:, None], 0.0, h)
    adj = _gcn_norm_adj(edge_index, N, N)
    return adj @ (h @ params["gcn_w"].T) + params["gcn_b"][None, :]


# ----------------------------------------------------------------------------
# Deterministic parameter init (shapes follow the PyTorch __init__)
# ----------------------------------------------------------------------------
def init_params(key, in_dim, out_dim):
    k1, k2, k3 = jax.random.split(key, 3)
    s = 0.1
    return {
        "prelu_a": jnp.full((1, 1), 0.25, jnp.float32),                        # nn.PReLU()
        "enc_to_dec_w": jax.random.normal(k1, (in_dim, in_dim), jnp.float32) * s,
        "gcn_w": jax.random.normal(k2, (out_dim, in_dim), jnp.float32) * s,    # GCNConv weight
        "gcn_b": jax.random.normal(k3, (out_dim,), jnp.float32) * s,           # GCNConv bias
        "dec_token": jnp.zeros((1, in_dim), jnp.float32),                      # unused in forward
    }


# ----------------------------------------------------------------------------
if __name__ == "__main__":
    key = jax.random.PRNGKey(0)
    kx, kp = jax.random.split(key)

    num_nodes, in_dim, out_dim = 8, 64, 32
    x = jax.random.normal(kx, (num_nodes, in_dim), jnp.float32)
    # bidirectional ring graph over 8 nodes
    edge_index = jnp.array(
        [[0, 1, 1, 2, 2, 3, 3, 4, 4, 5, 5, 6, 6, 7, 7, 0],
         [1, 0, 2, 1, 3, 2, 4, 3, 5, 4, 6, 5, 7, 6, 0, 7]], jnp.int32)
    mask_vector = jnp.array([[1], [0], [0], [1], [0], [1], [0], [0]], jnp.int32)

    params = init_params(kp, in_dim, out_dim)

    out = gnn_decoder_forward(params, x, edge_index, mask_vector)
    jax.block_until_ready(out)

    ref = gnn_decoder_reference(params, x, edge_index, mask_vector)
    assert out.shape == (num_nodes, out_dim)
    assert bool(jnp.all(jnp.isfinite(out)))
    assert bool(jnp.allclose(out, ref, atol=1e-4, rtol=1e-4))
    print("KERNEL_OK")
</pallas_src>

<mosaic_0001>
module attributes {stable_mosaic.version = 11 : i64} {
  func.func private @main(%arg0: i32) attributes {dimension_semantics = [#tpu.dimension_semantics<core_parallel>], iteration_bounds = array<i64: 2>, tpu.core_type = #tpu.core_type<sc_scalar_subcore>, window_params = []} {
    return
  }
}

module attributes {stable_mosaic.version = 11 : i64} {
  func.func private @main(%arg0: i32) attributes {dimension_semantics = [#tpu.dimension_semantics<core_parallel>], iteration_bounds = array<i64: 2>, tpu.core_type = #tpu.core_type<sc_scalar_subcore>, window_params = []} {
    return
  }
}

module attributes {stable_mosaic.version = 11 : i64} {
  func.func @_gnn_decoder_kernel(%arg0: i32, %arg1: memref<1x1xf32, #tpu.memory_space<vmem>>, %arg2: memref<8x64xf32, #tpu.memory_space<vmem>>, %arg3: memref<8x1xf32, #tpu.memory_space<vmem>>, %arg4: memref<64x64xf32, #tpu.memory_space<vmem>>, %arg5: memref<64x32xf32, #tpu.memory_space<vmem>>, %arg6: memref<1x32xf32, #tpu.memory_space<vmem>>, %arg7: memref<8x8xf32, #tpu.memory_space<vmem>>, %arg8: memref<8x32xf32, #tpu.memory_space<vmem>>, %arg9: memref<8x32xf32, #tpu.memory_space<vmem>>) attributes {dimension_semantics = [#tpu.dimension_semantics<arbitrary>], iteration_bounds = array<i64: 1>, scalar_prefetch = 0 : i64, scratch_operands = 1 : i64, tpu.core_type = #tpu.core_type<tc>, window_params = [{pipeline_mode = #tpu.pipeline_mode<synchronous>, transform_indices = @transform_0, window_bounds = array<i64: 1, 1>}, {pipeline_mode = #tpu.pipeline_mode<synchronous>, transform_indices = @transform_1, window_bounds = array<i64: 8, 64>}, {pipeline_mode = #tpu.pipeline_mode<synchronous>, transform_indices = @transform_2, window_bounds = array<i64: 8, 1>}, {pipeline_mode = #tpu.pipeline_mode<synchronous>, transform_indices = @transform_3, window_bounds = array<i64: 64, 64>}, {pipeline_mode = #tpu.pipeline_mode<synchronous>, transform_indices = @transform_4, window_bounds = array<i64: 64, 32>}, {pipeline_mode = #tpu.pipeline_mode<synchronous>, transform_indices = @transform_5, window_bounds = array<i64: 1, 32>}, {transform_indices = @transform_6, window_bounds = array<i64: 8, 8>}, {transform_indices = @transform_7, window_bounds = array<i64: 8, 32>}]} {
    %c0_i32 = arith.constant 0 : i32
    %0 = arith.cmpi eq, %arg0, %c0_i32 : i32
    %1 = arith.extui %0 : i1 to i32
    %c0_i32_0 = arith.constant 0 : i32
    %2 = arith.cmpi ne, %1, %c0_i32_0 : i32
    scf.if %2 {
      %c0_8 = arith.constant 0 : index
      %c0_9 = arith.constant 0 : index
      %10 = vector.load %arg2[%c0_8, %c0_9] : memref<8x64xf32, #tpu.memory_space<vmem>>, vector<8x64xf32>
      %c0_10 = arith.constant 0 : index
      %c0_11 = arith.constant 0 : index
      %11 = vector.load %arg1[%c0_10, %c0_11] : memref<1x1xf32, #tpu.memory_space<vmem>>, vector<1x1xf32>
      %cst_12 = arith.constant 0.000000e+00 : f32
      %12 = vector.broadcast %cst_12 : f32 to vector<8x64xf32>
      %13 = arith.cmpf oge, %10, %12 : vector<8x64xf32>
      %14 = vector.broadcast %11 : vector<1x1xf32> to vector<8x64xf32>
      %15 = arith.mulf %10, %14 : vector<8x64xf32>
      %16 = arith.select %13, %10, %15 : vector<8x64xi1>, vector<8x64xf32>
      %c0_13 = arith.constant 0 : index
      %c0_14 = arith.constant 0 : index
      %17 = vector.load %arg4[%c0_13, %c0_14] : memref<64x64xf32, #tpu.memory_space<vmem>>, vector<64x64xf32>
      %cst_15 = arith.constant dense<0.000000e+00> : vector<8x64xf32>
      %18 = tpu.matmul %16, %17, %cst_15 {dimension_numbers = #tpu.dot_dimension_numbers<[1], [0], [0], [1], [0, 0, 1, 1], [], []>} : vector<8x64xf32>, vector<64x64xf32>, vector<8x64xf32> -> vector<8x64xf32>
      %c0_16 = arith.constant 0 : index
      %c0_17 = arith.constant 0 : index
      %19 = vector.load %arg3[%c0_16, %c0_17] : memref<8x1xf32, #tpu.memory_space<vmem>>, vector<8x1xf32>
      %20 = vector.broadcast %19 : vector<8x1xf32> to vector<8x64xf32>
      %21 = arith.mulf %18, %20 : vector<8x64xf32>
      %c0_18 = arith.constant 0 : index
      %c0_19 = arith.constant 0 : index
      %22 = vector.load %arg5[%c0_18, %c0_19] : memref<64x32xf32, #tpu.memory_space<vmem>>, vector<64x32xf32>
      %cst_20 = arith.constant dense<0.000000e+00> : vector<8x32xf32>
      %23 = tpu.matmul %21, %22, %cst_20 {dimension_numbers = #tpu.dot_dimension_numbers<[1], [0], [0], [1], [0, 0, 1, 1], [], []>} : vector<8x64xf32>, vector<64x32xf32>, vector<8x32xf32> -> vector<8x32xf32>
      %c0_21 = arith.constant 0 : index
      %c0_22 = arith.constant 0 : index
      %24 = vector.load %arg9[%c0_21, %c0_22] : memref<8x32xf32, #tpu.memory_space<vmem>>, vector<8x32xf32>
      tpu.vector_store %arg9[%c0_21, %c0_22], %23 {strides = array<i32>} : memref<8x32xf32, #tpu.memory_space<vmem>>, vector<8x32xf32>,
    } else {
    }
    %c0 = arith.constant 0 : index
    %c0_1 = arith.constant 0 : index
    %3 = vector.load %arg7[%c0, %c0_1] : memref<8x8xf32, #tpu.memory_space<vmem>>, vector<8x8xf32>
    %c0_2 = arith.constant 0 : index
    %c0_3 = arith.constant 0 : index
    %4 = vector.load %arg9[%c0_2, %c0_3] : memref<8x32xf32, #tpu.memory_space<vmem>>, vector<8x32xf32>
    %cst = arith.constant dense<0.000000e+00> : vector<8x32xf32>
    %5 = tpu.matmul %3, %4, %cst {dimension_numbers = #tpu.dot_dimension_numbers<[1], [0], [0], [1], [0, 0, 1, 1], [], []>} : vector<8x8xf32>, vector<8x32xf32>, vector<8x32xf32> -> vector<8x32xf32>
    %c0_4 = arith.constant 0 : index
    %c0_5 = arith.constant 0 : index
    %6 = vector.load %arg6[%c0_4, %c0_5] : memref<1x32xf32, #tpu.memory_space<vmem>>, vector<1x32xf32>
    %7 = vector.broadcast %6 : vector<1x32xf32> to vector<8x32xf32>
    %8 = arith.addf %5, %7 : vector<8x32xf32>
    %c0_6 = arith.constant 0 : index
    %c0_7 = arith.constant 0 : index
    %9 = vector.load %arg8[%c0_6, %c0_7] : memref<8x32xf32, #tpu.memory_space<vmem>>, vector<8x32xf32>
    tpu.vector_store %arg8[%c0_6, %c0_7], %8 {strides = array<i32>} : memref<8x32xf32, #tpu.memory_space<vmem>>, vector<8x32xf32>,
    return
  }
  func.func @transform_0(%arg0: i32) -> (i32, i32) {
    %c0_i32 = arith.constant 0 : i32
    %c0_i32_0 = arith.constant 0 : i32
    %c0_i32_1 = arith.constant 0 : i32
    return %c0_i32, %c0_i32_0 : i32, i32
  }
  func.func @transform_1(%arg0: i32) -> (i32, i32) {
    %c0_i32 = arith.constant 0 : i32
    %c0_i32_0 = arith.constant 0 : i32
    %c0_i32_1 = arith.constant 0 : i32
    return %c0_i32, %c0_i32_0 : i32, i32
  }
  func.func @transform_2(%arg0: i32) -> (i32, i32) {
    %c0_i32 = arith.constant 0 : i32
    %c0_i32_0 = arith.constant 0 : i32
    %c0_i32_1 = arith.constant 0 : i32
    return %c0_i32, %c0_i32_0 : i32, i32
  }
  func.func @transform_3(%arg0: i32) -> (i32, i32) {
    %c0_i32 = arith.constant 0 : i32
    %c0_i32_0 = arith.constant 0 : i32
    %c0_i32_1 = arith.constant 0 : i32
    return %c0_i32, %c0_i32_0 : i32, i32
  }
  func.func @transform_4(%arg0: i32) -> (i32, i32) {
    %c0_i32 = arith.constant 0 : i32
    %c0_i32_0 = arith.constant 0 : i32
    %c0_i32_1 = arith.constant 0 : i32
    return %c0_i32, %c0_i32_0 : i32, i32
  }
  func.func @transform_5(%arg0: i32) -> (i32, i32) {
    %c0_i32 = arith.constant 0 : i32
    %c0_i32_0 = arith.constant 0 : i32
    %c0_i32_1 = arith.constant 0 : i32
    return %c0_i32, %c0_i32_0 : i32, i32
  }
  func.func @transform_6(%arg0: i32) -> (i32, i32) {
    %c0_i32 = arith.constant 0 : i32
    %c0_i32_0 = arith.constant 0 : i32
    return %arg0, %c0_i32 : i32, i32
  }
  func.func @transform_7(%arg0: i32) -> (i32, i32) {
    %c0_i32 = arith.constant 0 : i32
    %c0_i32_0 = arith.constant 0 : i32
    return %arg0, %c0_i32 : i32, i32
  }
}

</mosaic_0001>

<llo_original>
// kernel: gnn_decoder_forward.1
$region0: #{gnn_decoder_forward.1}
  #allocation0 [shape = 'u32[]', space=smem, size = 0x4, offset = 0x4, fixed_abs, tag = 'smem constant byte address 0x4 - core index']
  #allocation1 [shape = 'u32[144,128]{1,0:T(1,128)}', space=vmem, size = 0x12000, scoped, tag = 'internal scratch']
  #allocation2 [shape = 'f32[8,32]{1,0:T(8,128)}', space=vmem, size = 0x1000, scoped, tag = 'scratch operand']
  #allocation3 [shape = 'f32[1,1]{1,0:T(1,128)S(1)}', space=vmem, size = 0x200, scoped, tag = 'scoped memory for gnn_decoder_forward.1']
  %s0 = inlined_call_operand.<no memory space> [shape: f32[1,1], index: 0, kind: input, shape index: {}]
  %s1 = inlined_call_operand.vmem [shape: f32[8,64], index: 1, kind: input, shape index: {}]
  %s2 = inlined_call_operand.vmem [shape: f32[8,1], index: 2, kind: input, shape index: {}]
  %s3 = inlined_call_operand.vmem [shape: f32[64,64], index: 3, kind: input, shape index: {}]
  %s4 = inlined_call_operand.vmem [shape: f32[64,32], index: 4, kind: input, shape index: {}]
  %s5 = inlined_call_operand.vmem [shape: f32[1,32], index: 5, kind: input, shape index: {}]
  %s6 = inlined_call_operand.vmem [shape: f32[8,8], index: 6, kind: input, shape index: {}]
  %s7 = inlined_call_operand.hbm [shape: f32[8,32], index: 7, kind: output, shape index: {}]
  %s8 = sld [smem:[#allocation0]]
  $region42: #{gnn_decoder_forward.1} parent=0
    _
  %s10 = ssub.s32 1, %s8
  %s11 = scalar_select 0, %s10, %s8
  %v12 = vstv %s0
  %13 = vst [vmem:[#allocation3] sm:$0x1] %v12
  $region1: #{gnn_decoder_forward.1} parent=0
    #allocation4 [shape = 'u8[4096]{0}', space=vmem, size = 0x1000, scoped, tag = 'output window, operand 0, single buffered']
    #allocation5 [shape = 's32[1]{0}', space=sflag, size = 0x4, scoped, tag = 'scoped memory for gnn_decoder_forward.1']
    %14 = vsyncpa [#allocation5], 0
    // Predicated region
    $region2: #{gnn_decoder_forward.1} parent=1 // pred_check
      _
    $region3: #{gnn_decoder_forward.1} parent=1 // pred_check_branch
      %16 = sbr.rel (0) target = $region5
    $region4: #{gnn_decoder_forward.1} parent=1 // pred_region
      _
    $region5: #{gnn_decoder_forward.1} parent=1 // pred_fallthru
      _
    // Predicated region
    $region6: #{gnn_decoder_forward.1} parent=1 // pred_check
      _
    $region7: #{gnn_decoder_forward.1} parent=1 // pred_check_branch
      %18 = sbr.rel (0) target = $region9
    $region8: #{gnn_decoder_forward.1} parent=1 // pred_region
      _
    $region9: #{gnn_decoder_forward.1} parent=1 // pred_fallthru
      _
    // Predicated region
    $region10: #{gnn_decoder_forward.1} parent=1 // pred_check
      _
    $region11: #{gnn_decoder_forward.1} parent=1 // pred_check_branch
      %20 = sbr.rel (0) target = $region13
    $region12: #{gnn_decoder_forward.1} parent=1 // pred_region
      _
    $region13: #{gnn_decoder_forward.1} parent=1 // pred_fallthru
      _
    // Predicated region
    $region14: #{gnn_decoder_forward.1} parent=1 // pred_check
      _
    $region15: #{gnn_decoder_forward.1} parent=1 // pred_check_branch
      %22 = sbr.rel (0) target = $region17
    $region16: #{gnn_decoder_forward.1} parent=1 // pred_region
      _
    $region17: #{gnn_decoder_forward.1} parent=1 // pred_fallthru
      _
    // Predicated region
    $region18: #{gnn_decoder_forward.1} parent=1 // pred_check
      _
    $region19: #{gnn_decoder_forward.1} parent=1 // pred_check_branch
      %24 = sbr.rel (0) target = $region21
    $region20: #{gnn_decoder_forward.1} parent=1 // pred_region
      _
    $region21: #{gnn_decoder_forward.1} parent=1 // pred_fallthru
      _
    // Predicated region
    $region22: #{gnn_decoder_forward.1} parent=1 // pred_check
      _
    $region23: #{gnn_decoder_forward.1} parent=1 // pred_check_branch
      %26 = sbr.rel (0) target = $region25
    $region24: #{gnn_decoder_forward.1} parent=1 // pred_region
      _
    $region25: #{gnn_decoder_forward.1} parent=1 // pred_fallthru
      _
    // Predicated region
    $region26: #{gnn_decoder_forward.1} parent=1 // pred_check
      _
    $region27: #{gnn_decoder_forward.1} parent=1 // pred_check_branch
      %28 = sbr.rel (0) target = $region29
    $region28: #{gnn_decoder_forward.1} parent=1 // pred_region
      _
    $region29: #{gnn_decoder_forward.1} parent=1 // pred_fallthru
      _
    %p29 = scmp.eq.s32.totalorder 0, 0
    // Predicated region
    $region30: #{gnn_decoder_forward.1} parent=1 // pred_check
      %p30 = pneg %p29
    $region31: #{gnn_decoder_forward.1} parent=1 // pred_check_branch
      %32 = sbr.rel (%p30) target = $region33
    $region32: #{gnn_decoder_forward.1} parent=1 // pred_region
      %v33 = vld [vmem:[%s1] sm:$0xff]
      %v34 = vld [vmem:[#allocation3] sm:$0x1]
      %vm35 = vcmp.ge.f32.partialorder %v33, 0.0
      %v37 = vlaneseq
      %v38 = vshrl.u32 %v37, 7
      %v39 = vsub.s32 0, %v38
      %v40 = vrot.slane %v34, %v39
      %41 = vset.pattern.permute.xlu0 0
      %42 = vperm.xlu0 %41, %v40
      %v43 = vpop.permute.xlu0 %42
      %v45 = vmul.f32 %v33, %v43
      %v46 = vsel %vm35, %v33, %v45
      %v47 = vld [vmem:[%s3] sm:$0xff]
      %v48 = vld [vmem:[%s3 + $0x8] sm:$0xff]
      %v49 = vld [vmem:[%s3 + $0x10] sm:$0xff]
      %v50 = vld [vmem:[%s3 + $0x18] sm:$0xff]
      %v51 = vld [vmem:[%s3 + $0x20] sm:$0xff]
      %v52 = vld [vmem:[%s3 + $0x28] sm:$0xff]
      %v53 = vld [vmem:[%s3 + $0x30] sm:$0xff]
      %v54 = vld [vmem:[%s3 + $0x38] sm:$0xff]
      %vm55 = vcmask 523264
      %v57 = vsel %vm55, %v46, 0
      %59 = vmatprep.subr.mxu0 0.0
      %60 = vmatpush1.msra.mxu0 0.0
      %61 = vmatprep.subr.mxu0 0.0
      %62 = vmatpush1.msra.mxu0 0.0
      %63 = vmatprep.subr.mxu0 0.0
      %64 = vmatpush1.msra.mxu0 0.0
      %65 = vmatprep.subr.mxu0 0.0
      %66 = vmatpush1.msra.mxu0 0.0
      %67 = vmatprep.subr.mxu0 0.0
      %68 = vmatpush1.msra.mxu0 0.0
      %69 = vmatprep.subr.mxu0 0.0
      %70 = vmatpush1.msra.mxu0 0.0
      %71 = vmatprep.subr.mxu0 0.0
      %72 = vmatpush1.msra.mxu0 0.0
      %73 = vmatprep.subr.mxu0 0.0
      %74 = vmatpush1.msra.mxu0 0.0
      %75 = vmatprep.subr.mxu0 0.0
      %76 = vmatpush1.msra.mxu0 %v54
      %77 = vmatprep.subr.mxu0 0.0
      %78 = vmatpush1.msra.mxu0 %v53
      %79 = vmatprep.subr.mxu0 0.0
      %80 = vmatpush1.msra.mxu0 %v52
      %81 = vmatprep.subr.mxu0 0.0
      %82 = vmatpush1.msra.mxu0 %v51
      %83 = vmatprep.subr.mxu0 0.0
      %84 = vmatpush1.msra.mxu0 %v50
      %85 = vmatprep.subr.mxu0 0.0
      %86 = vmatpush1.msra.mxu0 %v49
      %87 = vmatprep.subr.mxu0 0.0
      %88 = vmatpush1.msra.mxu0 %v48
      %89 = vmatprep.subr.mxu0 0.0
      %90 = vmatpush1.msra.mxu0 %v47
      %91 = vmatprep.subr.mxu0 0.0
      %92 = vmatpush2.msra.mxu0 0.0
      %93 = vmatprep.subr.mxu0 0.0
      %94 = vmatpush2.msra.mxu0 0.0
      %95 = vmatprep.subr.mxu0 0.0
      %96 = vmatpush2.msra.mxu0 0.0
      %97 = vmatprep.subr.mxu0 0.0
      %98 = vmatpush2.msra.mxu0 0.0
      %99 = vmatprep.subr.mxu0 0.0
      %100 = vmatpush2.msra.mxu0 0.0
      %101 = vmatprep.subr.mxu0 0.0
      %102 = vmatpush2.msra.mxu0 0.0
      %103 = vmatprep.subr.mxu0 0.0
      %104 = vmatpush2.msra.mxu0 0.0
      %105 = vmatprep.subr.mxu0 0.0
      %106 = vmatpush2.msra.mxu0 0.0
      %107 = vmatprep.subr.mxu0 0.0
      %108 = vmatpush2.msra.mxu0 0.0
      %109 = vmatprep.subr.mxu0 0.0
      %110 = vmatpush2.msra.mxu0 0.0
      %111 = vmatprep.subr.mxu0 0.0
      %112 = vmatpush2.msra.mxu0 0.0
      %113 = vmatprep.subr.mxu0 0.0
      %114 = vmatpush2.msra.mxu0 0.0
      %115 = vmatprep.subr.mxu0 0.0
      %116 = vmatpush2.msra.mxu0 0.0
      %117 = vmatprep.subr.mxu0 0.0
      %118 = vmatpush2.msra.mxu0 0.0
      %119 = vmatprep.subr.mxu0 0.0
      %120 = vmatpush2.msra.mxu0 0.0
      %121 = vmatprep.subr.mxu0 0.0
      %122 = vmatpush2.msra.mxu0 0.0
      %123 = vmatprep.mubr.f32.mxu0 0.0
      %124 = vmatmul.mubr.f32.gmra.mxu0 %v57
      %v125 = vpop.f32.mrf.mxu0
      %v126 = vadd.f32 0.0, %v125
      %v127 = vpop.f32.mrf.mxu0
      %128 = vdwg.mxu0
      %v129 = vld [vmem:[%s2] sm:$0xff]
      %131 = vset.pattern.permute.xlu0 0
      %132 = vperm.xlu0 %131, %v129
      %v133 = vpop.permute.xlu0 %132
      %v135 = vmul.f32 %v126, %v133
      %v136 = vld [vmem:[%s4] sm:$0xff]
      %v137 = vld [vmem:[%s4 + $0x8] sm:$0xff]
      %v138 = vld [vmem:[%s4 + $0x10] sm:$0xff]
      %v139 = vld [vmem:[%s4 + $0x18] sm:$0xff]
      %v140 = vld [vmem:[%s4 + $0x20] sm:$0xff]
      %v141 = vld [vmem:[%s4 + $0x28] sm:$0xff]
      %v142 = vld [vmem:[%s4 + $0x30] sm:$0xff]
      %v143 = vld [vmem:[%s4 + $0x38] sm:$0xff]
      %v145 = vsel %vm55, %v135, 0
      %147 = vmatprep.subr.mxu0 0.0
      %148 = vmatpush1.msra.mxu0 0.0
      %149 = vmatprep.subr.mxu0 0.0
      %150 = vmatpush1.msra.mxu0 0.0
      %151 = vmatprep.subr.mxu0 0.0
      %152 = vmatpush1.msra.mxu0 0.0
      %153 = vmatprep.subr.mxu0 0.0
      %154 = vmatpush1.msra.mxu0 0.0
      %155 = vmatprep.subr.mxu0 0.0
      %156 = vmatpush1.msra.mxu0 0.0
      %157 = vmatprep.subr.mxu0 0.0
      %158 = vmatpush1.msra.mxu0 0.0
      %159 = vmatprep.subr.mxu0 0.0
      %160 = vmatpush1.msra.mxu0 0.0
      %161 = vmatprep.subr.mxu0 0.0
      %162 = vmatpush1.msra.mxu0 0.0
      %163 = vmatprep.subr.mxu0 0.0
      %164 = vmatpush1.msra.mxu0 %v143
      %165 = vmatprep.subr.mxu0 0.0
      %166 = vmatpush1.msra.mxu0 %v142
      %167 = vmatprep.subr.mxu0 0.0
      %168 = vmatpush1.msra.mxu0 %v141
      %169 = vmatprep.subr.mxu0 0.0
      %170 = vmatpush1.msra.mxu0 %v140
      %171 = vmatprep.subr.mxu0 0.0
      %172 = vmatpush1.msra.mxu0 %v139
      %173 = vmatprep.subr.mxu0 0.0
      %174 = vmatpush1.msra.mxu0 %v138
      %175 = vmatprep.subr.mxu0 0.0
      %176 = vmatpush1.msra.mxu0 %v137
      %177 = vmatprep.subr.mxu0 0.0
      %178 = vmatpush1.msra.mxu0 %v136
      %179 = vmatprep.subr.mxu0 0.0
      %180 = vmatpush2.msra.mxu0 0.0
      %181 = vmatprep.subr.mxu0 0.0
      %182 = vmatpush2.msra.mxu0 0.0
      %183 = vmatprep.subr.mxu0 0.0
      %184 = vmatpush2.msra.mxu0 0.0
      %185 = vmatprep.subr.mxu0 0.0
      %186 = vmatpush2.msra.mxu0 0.0
      %187 = vmatprep.subr.mxu0 0.0
      %188 = vmatpush2.msra.mxu0 0.0
      %189 = vmatprep.subr.mxu0 0.0
      %190 = vmatpush2.msra.mxu0 0.0
      %191 = vmatprep.subr.mxu0 0.0
      %192 = vmatpush2.msra.mxu0 0.0
      %193 = vmatprep.subr.mxu0 0.0
      %194 = vmatpush2.msra.mxu0 0.0
      %195 = vmatprep.subr.mxu0 0.0
      %196 = vmatpush2.msra.mxu0 0.0
      %197 = vmatprep.subr.mxu0 0.0
      %198 = vmatpush2.msra.mxu0 0.0
      %199 = vmatprep.subr.mxu0 0.0
      %200 = vmatpush2.msra.mxu0 0.0
      %201 = vmatprep.subr.mxu0 0.0
      %202 = vmatpush2.msra.mxu0 0.0
      %203 = vmatprep.subr.mxu0 0.0
      %204 = vmatpush2.msra.mxu0 0.0
      %205 = vmatprep.subr.mxu0 0.0
      %206 = vmatpush2.msra.mxu0 0.0
      %207 = vmatprep.subr.mxu0 0.0
      %208 = vmatpush2.msra.mxu0 0.0
      %209 = vmatprep.subr.mxu0 0.0
      %210 = vmatpush2.msra.mxu0 0.0
      %211 = vmatprep.mubr.f32.mxu0 0.0
      %212 = vmatmul.mubr.f32.gmra.mxu0 %v145
      %v213 = vpop.f32.mrf.mxu0
      %v214 = vadd.f32 0.0, %v213
      %v215 = vpop.f32.mrf.mxu0
      %216 = vdwg.mxu0
      %vm217 = vcmask 261120
      %218 = vst.msk [vmem:[#allocation2] sm:$0xff] %vm217, %v214
    $region33: #{gnn_decoder_forward.1} parent=1 // pred_fallthru
      _
    %v219 = vld [vmem:[%s6] sm:$0xff]
    %v220 = vld [vmem:[#allocation2] sm:$0xff]
    %v221 = vld [vmem:[%s5] sm:$0x1]
    %v223 = vlaneseq
    %v224 = vshrl.u32 %v223, 7
    %v225 = vsub.s32 0, %v224
    %v226 = vrot.slane %v221, %v225
    %vm228 = vcmask 64512
    %v230 = vsel %vm228, %v219, 0
    %232 = vmatprep.subr.mxu0 0.0
    %233 = vmatpush1.msra.mxu0 0.0
    %234 = vmatprep.subr.mxu0 0.0
    %235 = vmatpush1.msra.mxu0 0.0
    %236 = vmatprep.subr.mxu0 0.0
    %237 = vmatpush1.msra.mxu0 0.0
    %238 = vmatprep.subr.mxu0 0.0
    %239 = vmatpush1.msra.mxu0 0.0
    %240 = vmatprep.subr.mxu0 0.0
    %241 = vmatpush1.msra.mxu0 0.0
    %242 = vmatprep.subr.mxu0 0.0
    %243 = vmatpush1.msra.mxu0 0.0
    %244 = vmatprep.subr.mxu0 0.0
    %245 = vmatpush1.msra.mxu0 0.0
    %246 = vmatprep.subr.mxu0 0.0
    %247 = vmatpush1.msra.mxu0 0.0
    %248 = vmatprep.subr.mxu0 0.0
    %249 = vmatpush1.msra.mxu0 0.0
    %250 = vmatprep.subr.mxu0 0.0
    %251 = vmatpush1.msra.mxu0 0.0
    %252 = vmatprep.subr.mxu0 0.0
    %253 = vmatpush1.msra.mxu0 0.0
    %254 = vmatprep.subr.mxu0 0.0
    %255 = vmatpush1.msra.mxu0 0.0
    %256 = vmatprep.subr.mxu0 0.0
    %257 = vmatpush1.msra.mxu0 0.0
    %258 = vmatprep.subr.mxu0 0.0
    %259 = vmatpush1.msra.mxu0 0.0
    %260 = vmatprep.subr.mxu0 0.0
    %261 = vmatpush1.msra.mxu0 0.0
    %262 = vmatprep.subr.mxu0 0.0
    %263 = vmatpush1.msra.mxu0 %v220
    %264 = vmatprep.subr.mxu0 0.0
    %265 = vmatpush2.msra.mxu0 0.0
    %266 = vmatprep.subr.mxu0 0.0
    %267 = vmatpush2.msra.mxu0 0.0
    %268 = vmatprep.subr.mxu0 0.0
    %269 = vmatpush2.msra.mxu0 0.0
    %270 = vmatprep.subr.mxu0 0.0
    %271 = vmatpush2.msra.mxu0 0.0
    %272 = vmatprep.subr.mxu0 0.0
    %273 = vmatpush2.msra.mxu0 0.0
    %274 = vmatprep.subr.mxu0 0.0
    %275 = vmatpush2.msra.mxu0 0.0
    %276 = vmatprep.subr.mxu0 0.0
    %277 = vmatpush2.msra.mxu0 0.0
    %278 = vmatprep.subr.mxu0 0.0
    %279 = vmatpush2.msra.mxu0 0.0
    %280 = vmatprep.subr.mxu0 0.0
    %281 = vmatpush2.msra.mxu0 0.0
    %282 = vmatprep.subr.mxu0 0.0
    %283 = vmatpush2.msra.mxu0 0.0
    %284 = vmatprep.subr.mxu0 0.0
    %285 = vmatpush2.msra.mxu0 0.0
    %286 = vmatprep.subr.mxu0 0.0
    %287 = vmatpush2.msra.mxu0 0.0
    %288 = vmatprep.subr.mxu0 0.0
    %289 = vmatpush2.msra.mxu0 0.0
    %290 = vmatprep.subr.mxu0 0.0
    %291 = vmatpush2.msra.mxu0 0.0
    %292 = vmatprep.subr.mxu0 0.0
    %293 = vmatpush2.msra.mxu0 0.0
    %294 = vmatprep.subr.mxu0 0.0
    %295 = vmatpush2.msra.mxu0 0.0
    %296 = vmatprep.mubr.f32.mxu0 0.0
    %297 = vmatmul.mubr.f32.gmra.mxu0 %v230
    %v298 = vpop.f32.mrf.mxu0
    %v299 = vadd.f32 %v226, %v298
    %v300 = vpop.f32.mrf.mxu0
    %301 = vdwg.mxu0
    %vm302 = vcmask 261120
    %303 = vst.msk [vmem:[#allocation4] sm:$0xff] %vm302, %v299
    // Predicated region
    $region34: #{gnn_decoder_forward.1} parent=1 // pred_check
      _
    $region35: #{gnn_decoder_forward.1} parent=1 // pred_check_branch
      %305 = sbr.rel (0) target = $region37
    $region36: #{gnn_decoder_forward.1} parent=1 // pred_region
      %s307 = ssub.s32 128, 128
      %308 = vsyncadd [#allocation5], %s307
      %s310 = sshll.u32 [#allocation4], 4
      %s311 = int_to_ptr.vmem [resolvable:$true] %s310
      %313 = dma.vmem_to_hbm [thread:$0]  %s311, 128, %s7, [#allocation5]
    $region37: #{gnn_decoder_forward.1} parent=1 // pred_fallthru
      _
    // Predicated region
    $region38: #{gnn_decoder_forward.1} parent=1 // pred_check
      _
    $region39: #{gnn_decoder_forward.1} parent=1 // pred_check_branch
      %315 = sbr.rel (0) target = $region41
    $region40: #{gnn_decoder_forward.1} parent=1 // pred_region
      %316 = dma.done [#allocation5], 128
    $region41: #{gnn_decoder_forward.1} parent=1 // pred_fallthru
      _
    %317 = vsyncpa [#allocation5], 1

</llo_original>
